<compile_context>
chip_gen: v7x
topology: tpu7x:2x2x1
jax: 0.10.0
libtpu: 0.0.40
codegen_flags: <defaults>
</compile_context>

<pallas_src>
import functools

import jax
import jax.numpy as jnp
from jax.experimental import pallas as pl
from jax.experimental.pallas import tpu as pltpu


def _round_up(x, m):
    return (x + m - 1) // m * m


def _pick_chunk(n_pad, chunk_max):
    """Largest multiple-of-8 divisor of n_pad that is <= chunk_max."""
    if n_pad <= chunk_max:
        return n_pad
    cand = max(8, (chunk_max // 8) * 8)
    while cand > 8 and n_pad % cand != 0:
        cand -= 8
    return cand


def _vmem_capacity_bytes():
    try:
        info = pltpu.get_tpu_info()
        cap = getattr(info, "vmem_capacity_bytes", None)
        if cap:
            return int(cap)
    except Exception:
        pass
    return 128 * 1024 * 1024


def _triplet_wrt_kernel(x_ref, xt_ref, sqc_ref, tc_ref, sqr_ref, tr_ref,
                        diff_ref, *, n_valid, tk, n_chunks):
    """One grid step: tm query samples (lanes) vs. all N_pad samples, chunked
    over the reduction (sublane) axis with an online softmax."""
    xt_tile = xt_ref[...]                 # (d_pad, tm) matmul dtype (bf16/f32)
    sq_row = sqr_ref[...]                 # (1, tm)  f32 squared norms of queries
    t_row = tr_ref[...]                   # (1, tm)  int32 labels of queries

    def body(c, carry):
        m_ap, z_ap, s_ap, z_an, s_an = carry
        r0 = pl.multiple_of(c * tk, 8)
        x_chunk = x_ref[pl.ds(r0, tk), :]                       # (tk, d_pad)
        # Gram[q, p] = <x_chunk[q], x_tile[p]> in natural MXU orientation.
        gram = jnp.dot(x_chunk, xt_tile,
                       preferred_element_type=jnp.float32)      # (tk, tm) f32
        sq_col = sqc_ref[pl.ds(r0, tk), :]                      # (tk, 1) f32
        t_col = tc_ref[pl.ds(r0, tk), :]                        # (tk, 1) i32
        dist = jnp.sqrt(jnp.maximum(sq_col + sq_row - 2.0 * gram, 1e-12))

        valid = (jax.lax.broadcasted_iota(jnp.int32, (tk, 1), 0) + r0) < n_valid
        same = t_col == t_row                                   # (tk, tm) bool
        pos = jnp.logical_and(same, valid)
        neg = jnp.logical_and(jnp.logical_not(same), valid)

        # -- positive branch: online softmax over the reduction axis ---------
        dist_ap = jnp.where(pos, dist, 0.0)
        m_new = jnp.maximum(m_ap, jnp.max(dist_ap, axis=0, keepdims=True))
        scale = jnp.exp(m_ap - m_new)
        e_ap = jnp.exp(dist_ap - m_new)
        z_ap = z_ap * scale + jnp.sum(jnp.where(pos, e_ap, 0.0),
                                      axis=0, keepdims=True)
        s_ap = s_ap * scale + jnp.sum(dist_ap * e_ap, axis=0, keepdims=True)

        # -- negative branch: max((-dist_an) * is_neg) == 0 exactly, so the
        #    stabilizing max pass is dropped (bit-identical to the reference).
        dist_an = jnp.where(neg, dist, 0.0)
        e_an = jnp.exp(-dist_an)
        z_an = z_an + jnp.sum(jnp.where(neg, e_an, 0.0), axis=0, keepdims=True)
        s_an = s_an + jnp.sum(dist_an * e_an, axis=0, keepdims=True)
        return m_new, z_ap, s_ap, z_an, s_an

    zeros = jnp.zeros(sq_row.shape, jnp.float32)
    init = (zeros, zeros, zeros, zeros, zeros)
    _, z_ap, s_ap, z_an, s_an = jax.lax.fori_loop(
        0, n_chunks, body, init, unroll=(n_chunks <= 8))

    furthest_positive = s_ap / (z_ap + 1e-6)
    closest_negative = s_an / (z_an + 1e-6)
    diff_ref[...] = closest_negative - furthest_positive


def _run_pallas(args, *, n_pad, d_pad, tm, tk, n_valid, num_tiles,
                vmem_limit, single_buffer):
    kernel = functools.partial(_triplet_wrt_kernel, n_valid=n_valid, tk=tk,
                               n_chunks=n_pad // tk)
    const_kw = {"pipeline_mode": pl.Buffered(1)} if single_buffer else {}
    call = pl.pallas_call(
        kernel,
        grid=(num_tiles,),
        out_shape=jax.ShapeDtypeStruct((1, n_pad), jnp.float32),
        in_specs=[
            # resident full x (matmul dtype), constant index -> single buffer
            pl.BlockSpec((n_pad, d_pad), lambda i: (0, 0), **const_kw),
            # pre-transposed RHS tile (d_pad, tm), pipelined per grid step
            pl.BlockSpec((d_pad, tm), lambda i: (0, i)),
            # squared norms / labels in column layout (constant index)
            pl.BlockSpec((n_pad, 1), lambda i: (0, 0), **const_kw),
            pl.BlockSpec((n_pad, 1), lambda i: (0, 0), **const_kw),
            # squared norms / labels of the query tile (row layout)
            pl.BlockSpec((1, tm), lambda i: (0, i)),
            pl.BlockSpec((1, tm), lambda i: (0, i)),
        ],
        out_specs=pl.BlockSpec((1, tm), lambda i: (0, i)),   # lane-dense diff
        compiler_params=pltpu.CompilerParams(
            dimension_semantics=("parallel",),
            vmem_limit_bytes=int(vmem_limit),
        ),
    )
    return call(*args)


def triplet_loss_wrt(inputs, targets, normalize_feature=False,
                     use_bf16_gram=True, tm_max=None, chunk_max=512):
    """Pallas implementation of TripletLoss_WRT.forward.

    Args:
      inputs:  (N, D) float embeddings.
      targets: (N,) integer identity labels.
      use_bf16_gram: cast x to bf16 for the MXU Gram matmul only (f32 acc).
    Returns:
      (loss: f32 scalar device array, correct: i32 device array, N: int)
    """
    inputs = inputs.astype(jnp.float32)
    if normalize_feature:
        nrm = jnp.sqrt(jnp.sum(inputs * inputs, axis=-1, keepdims=True))
        inputs = inputs / (nrm + 1e-12)

    n, d = inputs.shape
    vmem_cap = _vmem_capacity_bytes()
    if tm_max is None:
        # Larger tiles where VMEM headroom allows (v5e/v6e: 128 MiB, v7x: 64 MiB).
        tm_max = 512 if vmem_cap >= (100 << 20) else 256

    d_pad = _round_up(d, 128)
    n_pad = _round_up(n, 8)
    if n_pad <= tm_max:
        tm = n_pad                                  # single tile, block == full dims
    else:
        tm = max(128, (tm_max // 128) * 128)        # lane-dense tiles
        n_pad = _round_up(n_pad, tm)
    num_tiles = n_pad // tm
    tk = _pick_chunk(n_pad, chunk_max)              # reduction chunk (multiple of 8)

    x = jnp.pad(inputs, ((0, n_pad - n), (0, d_pad - d)))
    sq = jnp.sum(x * x, axis=1)                     # f32 squared norms (exact path)
    sq_col = sq.reshape(n_pad, 1)
    sq_row = sq.reshape(1, n_pad)
    t = jnp.pad(targets.astype(jnp.int32), (0, n_pad - n), constant_values=-1)
    t_col = t.reshape(n_pad, 1)
    t_row = t.reshape(1, n_pad)

    mm_dtype = jnp.bfloat16 if use_bf16_gram else jnp.float32
    x_mm = x.astype(mm_dtype)                       # resident LHS, (n_pad, d_pad)
    x_t = jnp.transpose(x_mm)                       # RHS source, (d_pad, n_pad)

    # Generation-aware VMEM budget: ~48 MiB on 128 MiB chips, ~40 MiB on 64 MiB chips.
    vmem_limit = min(48 << 20, (vmem_cap * 5) // 8)
    resident = int(x_mm.size) * jnp.dtype(mm_dtype).itemsize
    vmem_limit = min(vmem_cap - (4 << 20),
                     max(vmem_limit, 2 * resident + (8 << 20)))

    args = (x_mm, x_t, sq_col, t_col, sq_row, t_row)
    common = dict(n_pad=n_pad, d_pad=d_pad, tm=tm, tk=tk, n_valid=n,
                  num_tiles=num_tiles, vmem_limit=vmem_limit)
    try:
        diff_ps = _run_pallas(args, single_buffer=True, **common)
    except Exception:
        # Fallback if this Pallas build rejects pipeline_mode=pl.Buffered(1).
        diff_ps = _run_pallas(args, single_buffer=False, **common)

    diff = diff_ps[0, :n]
    # SoftMarginLoss(diff, y=1) = log(1 + exp(-diff)), numerically stable softplus.
    loss = jnp.mean(jnp.maximum(-diff, 0.0) + jnp.log1p(jnp.exp(-jnp.abs(diff))))
    correct = jnp.sum(diff >= 0.0).astype(jnp.int32)
    return loss, correct, n


def _reference(x, t):
    """Pure-JAX reference (same math as the PyTorch module, f32)."""
    x = x.astype(jnp.float32)
    sq = jnp.sum(x * x, axis=1, keepdims=True)
    dist = jnp.sqrt(jnp.maximum(sq + sq.T - 2.0 * (x @ x.T), 1e-12))
    is_pos = (t[:, None] == t[None, :]).astype(jnp.float32)
    is_neg = 1.0 - is_pos
    dap, dan = dist * is_pos, dist * is_neg

    def smw(d, m):
        mx = jnp.max(d * m, axis=1, keepdims=True)
        e = jnp.exp(d - mx)
        return e * m / (jnp.sum(e * m, axis=1, keepdims=True) + 1e-6)

    fp = jnp.sum(dap * smw(dap, is_pos), axis=1)
    cn = jnp.sum(dan * smw(-dan, is_neg), axis=1)
    diff = cn - fp
    loss = jnp.mean(jnp.maximum(-diff, 0.0) + jnp.log1p(jnp.exp(-jnp.abs(diff))))
    correct = jnp.sum(cn >= fp)
    return loss, correct


if __name__ == "__main__":
    key = jax.random.PRNGKey(0)
    k1, k2, k3 = jax.random.split(key, 3)

    # --- test 1: small batch, single tile, f32 Gram (tight check) -------------
    N, D = 8, 32
    inputs = jax.random.normal(k1, (N, D), dtype=jnp.float32)
    targets = jnp.array([0, 0, 1, 1, 2, 2, 3, 3], dtype=jnp.int32)

    loss, correct, n = triplet_loss_wrt(inputs, targets, use_bf16_gram=False)
    jax.block_until_ready(loss)
    rl, rc = _reference(inputs, targets)
    assert abs(float(loss) - float(rl)) < 1e-3, (float(loss), float(rl))
    assert abs(int(correct) - int(rc)) <= 1, (int(correct), int(rc))
    assert n == N

    # --- test 2: multi-tile grid + chunked reduction + padding, f32 Gram ------
    N2, D2 = 300, 96                    # -> N_pad=384 (3 tiles of 128), D_pad=128
    x2 = jax.random.normal(k2, (N2, D2), dtype=jnp.float32)
    t2 = jax.random.randint(k3, (N2,), 0, 30, dtype=jnp.int32)

    loss2, correct2, n2 = triplet_loss_wrt(x2, t2, use_bf16_gram=False,
                                           tm_max=128, chunk_max=128)
    jax.block_until_ready(loss2)
    rl2, rc2 = _reference(x2, t2)
    assert abs(float(loss2) - float(rl2)) < 2e-3, (float(loss2), float(rl2))
    assert abs(int(correct2) - int(rc2)) <= 2, (int(correct2), int(rc2))
    assert n2 == N2

    # --- test 3: default fast path (bf16 Gram, auto tile/chunk) ---------------
    loss3, correct3, _ = triplet_loss_wrt(x2, t2)
    jax.block_until_ready(loss3)
    assert abs(float(loss3) - float(rl2)) < 5e-2, (float(loss3), float(rl2))

    print("KERNEL_OK")
</pallas_src>

<mosaic_0001>
module attributes {stable_mosaic.version = 11 : i64} {
  func.func @_triplet_wrt_kernel(%arg0: i32, %arg1: memref<8x128xf32, #tpu.memory_space<vmem>>, %arg2: memref<128x8xf32, #tpu.memory_space<vmem>>, %arg3: memref<8x1xf32, #tpu.memory_space<vmem>>, %arg4: memref<8x1xi32, #tpu.memory_space<vmem>>, %arg5: memref<1x8xf32, #tpu.memory_space<vmem>>, %arg6: memref<1x8xi32, #tpu.memory_space<vmem>>, %arg7: memref<1x8xf32, #tpu.memory_space<vmem>>) attributes {dimension_semantics = [#tpu.dimension_semantics<parallel>], iteration_bounds = array<i64: 1>, scalar_prefetch = 0 : i64, scratch_operands = 0 : i64, tpu.core_type = #tpu.core_type<tc>, window_params = [{pipeline_mode = #tpu.pipeline_mode<synchronous>, transform_indices = @transform_0, window_bounds = array<i64: 8, 128>}, {transform_indices = @transform_1, window_bounds = array<i64: 128, 8>}, {pipeline_mode = #tpu.pipeline_mode<synchronous>, transform_indices = @transform_2, window_bounds = array<i64: 8, 1>}, {pipeline_mode = #tpu.pipeline_mode<synchronous>, transform_indices = @transform_3, window_bounds = array<i64: 8, 1>}, {transform_indices = @transform_4, window_bounds = array<i64: 1, 8>}, {transform_indices = @transform_5, window_bounds = array<i64: 1, 8>}, {transform_indices = @transform_6, window_bounds = array<i64: 1, 8>}]} {
    %c0 = arith.constant 0 : index
    %c0_0 = arith.constant 0 : index
    %0 = vector.load %arg2[%c0, %c0_0] : memref<128x8xf32, #tpu.memory_space<vmem>>, vector<128x8xf32>
    %c0_1 = arith.constant 0 : index
    %c0_2 = arith.constant 0 : index
    %1 = vector.load %arg5[%c0_1, %c0_2] : memref<1x8xf32, #tpu.memory_space<vmem>>, vector<1x8xf32>
    %c0_3 = arith.constant 0 : index
    %c0_4 = arith.constant 0 : index
    %2 = vector.load %arg6[%c0_3, %c0_4] : memref<1x8xi32, #tpu.memory_space<vmem>>, vector<1x8xi32>
    %cst = arith.constant 0.000000e+00 : f32
    %3 = vector.broadcast %cst : f32 to vector<1x8xf32>
    %c0_i32 = arith.constant 0 : i32
    %c8_i32 = arith.constant 8 : i32
    %4 = arith.muli %c0_i32, %c8_i32 : i32
    %5 = tpu.assume_multiple %4, 8 : i32
    %6 = arith.index_cast %5 : i32 to index
    %c0_5 = arith.constant 0 : index
    %7 = vector.load %arg1[%6, %c0_5] : memref<8x128xf32, #tpu.memory_space<vmem>>, vector<8x128xf32>
    %cst_6 = arith.constant dense<0.000000e+00> : vector<8x8xf32>
    %8 = tpu.matmul %7, %0, %cst_6 {dimension_numbers = #tpu.dot_dimension_numbers<[1], [0], [0], [1], [0, 0, 1, 1], [], []>} : vector<8x128xf32>, vector<128x8xf32>, vector<8x8xf32> -> vector<8x8xf32>
    %9 = arith.index_cast %5 : i32 to index
    %c0_7 = arith.constant 0 : index
    %10 = vector.load %arg3[%9, %c0_7] : memref<8x1xf32, #tpu.memory_space<vmem>>, vector<8x1xf32>
    %11 = arith.index_cast %5 : i32 to index
    %c0_8 = arith.constant 0 : index
    %12 = vector.load %arg4[%11, %c0_8] : memref<8x1xi32, #tpu.memory_space<vmem>>, vector<8x1xi32>
    %13 = vector.broadcast %10 : vector<8x1xf32> to vector<8x8xf32>
    %14 = vector.broadcast %1 : vector<1x8xf32> to vector<8x8xf32>
    %15 = arith.addf %13, %14 : vector<8x8xf32>
    %cst_9 = arith.constant 2.000000e+00 : f32
    %16 = vector.broadcast %cst_9 : f32 to vector<8x8xf32>
    %17 = arith.mulf %16, %8 : vector<8x8xf32>
    %18 = arith.subf %15, %17 : vector<8x8xf32>
    %cst_10 = arith.constant 9.99999996E-13 : f32
    %19 = vector.broadcast %cst_10 : f32 to vector<8x8xf32>
    %20 = arith.maximumf %18, %19 : vector<8x8xf32>
    %21 = math.sqrt %20 : vector<8x8xf32>
    %22 = tpu.iota {dimensions = array<i32: 0>} : vector<8x1xi32>
    %23 = vector.broadcast %5 : i32 to vector<8x1xi32>
    %24 = arith.addi %22, %23 : vector<8x1xi32>
    %c8_i32_11 = arith.constant 8 : i32
    %25 = vector.broadcast %c8_i32_11 : i32 to vector<8x1xi32>
    %26 = arith.cmpi slt, %24, %25 : vector<8x1xi32>
    %27 = vector.broadcast %12 : vector<8x1xi32> to vector<8x8xi32>
    %28 = vector.broadcast %2 : vector<1x8xi32> to vector<8x8xi32>
    %29 = arith.cmpi eq, %27, %28 : vector<8x8xi32>
    %30 = vector.broadcast %26 : vector<8x1xi1> to vector<8x8xi1>
    %31 = arith.andi %29, %30 : vector<8x8xi1>
    %cst_12 = arith.constant dense<true> : vector<8x8xi1>
    %32 = arith.xori %29, %cst_12 : vector<8x8xi1>
    %33 = vector.broadcast %26 : vector<8x1xi1> to vector<8x8xi1>
    %34 = arith.andi %32, %33 : vector<8x8xi1>
    %cst_13 = arith.constant 0.000000e+00 : f32
    %35 = vector.broadcast %cst_13 : f32 to vector<8x8xf32>
    %36 = arith.select %31, %21, %35 : vector<8x8xi1>, vector<8x8xf32>
    %cst_14 = arith.constant dense<0xFF800000> : vector<8xf32>
    %37 = vector.multi_reduction <maximumf>, %36, %cst_14 [0] : vector<8x8xf32> to vector<8xf32>
    %38 = vector.shape_cast %37 : vector<8xf32> to vector<1x8xf32>
    %39 = arith.maximumf %3, %38 : vector<1x8xf32>
    %40 = arith.subf %3, %39 : vector<1x8xf32>
    %41 = math.exp %40 : vector<1x8xf32>
    %42 = vector.broadcast %39 : vector<1x8xf32> to vector<8x8xf32>
    %43 = arith.subf %36, %42 : vector<8x8xf32>
    %44 = math.exp %43 : vector<8x8xf32>
    %45 = arith.mulf %3, %41 : vector<1x8xf32>
    %cst_15 = arith.constant 0.000000e+00 : f32
    %46 = vector.broadcast %cst_15 : f32 to vector<8x8xf32>
    %47 = arith.select %31, %44, %46 : vector<8x8xi1>, vector<8x8xf32>
    %cst_16 = arith.constant dense<0.000000e+00> : vector<8xf32>
    %48 = vector.multi_reduction <add>, %47, %cst_16 [0] : vector<8x8xf32> to vector<8xf32>
    %49 = vector.shape_cast %48 : vector<8xf32> to vector<1x8xf32>
    %50 = arith.addf %45, %49 : vector<1x8xf32>
    %51 = arith.mulf %3, %41 : vector<1x8xf32>
    %52 = arith.mulf %36, %44 : vector<8x8xf32>
    %cst_17 = arith.constant dense<0.000000e+00> : vector<8xf32>
    %53 = vector.multi_reduction <add>, %52, %cst_17 [0] : vector<8x8xf32> to vector<8xf32>
    %54 = vector.shape_cast %53 : vector<8xf32> to vector<1x8xf32>
    %55 = arith.addf %51, %54 : vector<1x8xf32>
    %cst_18 = arith.constant 0.000000e+00 : f32
    %56 = vector.broadcast %cst_18 : f32 to vector<8x8xf32>
    %57 = arith.select %34, %21, %56 : vector<8x8xi1>, vector<8x8xf32>
    %cst_19 = arith.constant 0.000000e+00 : f32
    %58 = vector.broadcast %cst_19 : f32 to vector<8x8xf32>
    %59 = arith.subf %58, %57 : vector<8x8xf32>
    %60 = math.exp %59 : vector<8x8xf32>
    %cst_20 = arith.constant 0.000000e+00 : f32
    %61 = vector.broadcast %cst_20 : f32 to vector<8x8xf32>
    %62 = arith.select %34, %60, %61 : vector<8x8xi1>, vector<8x8xf32>
    %cst_21 = arith.constant dense<0.000000e+00> : vector<8xf32>
    %63 = vector.multi_reduction <add>, %62, %cst_21 [0] : vector<8x8xf32> to vector<8xf32>
    %64 = vector.shape_cast %63 : vector<8xf32> to vector<1x8xf32>
    %65 = arith.addf %3, %64 : vector<1x8xf32>
    %66 = arith.mulf %57, %60 : vector<8x8xf32>
    %cst_22 = arith.constant dense<0.000000e+00> : vector<8xf32>
    %67 = vector.multi_reduction <add>, %66, %cst_22 [0] : vector<8x8xf32> to vector<8xf32>
    %68 = vector.shape_cast %67 : vector<8xf32> to vector<1x8xf32>
    %69 = arith.addf %3, %68 : vector<1x8xf32>
    %c1_i32 = arith.constant 1 : i32
    %cst_23 = arith.constant 9.99999997E-7 : f32
    %70 = vector.broadcast %cst_23 : f32 to vector<1x8xf32>
    %71 = arith.addf %50, %70 : vector<1x8xf32>
    %72 = arith.divf %55, %71 : vector<1x8xf32>
    %cst_24 = arith.constant 9.99999997E-7 : f32
    %73 = vector.broadcast %cst_24 : f32 to vector<1x8xf32>
    %74 = arith.addf %65, %73 : vector<1x8xf32>
    %75 = arith.divf %69, %74 : vector<1x8xf32>
    %76 = arith.subf %75, %72 : vector<1x8xf32>
    %c0_25 = arith.constant 0 : index
    %c0_26 = arith.constant 0 : index
    %77 = vector.load %arg7[%c0_25, %c0_26] : memref<1x8xf32, #tpu.memory_space<vmem>>, vector<1x8xf32>
    tpu.vector_store %arg7[%c0_25, %c0_26], %76 {strides = array<i32>} : memref<1x8xf32, #tpu.memory_space<vmem>>, vector<1x8xf32>,
    return
  }
  func.func @transform_0(%arg0: i32) -> (i32, i32) {
    %c0_i32 = arith.constant 0 : i32
    %c0_i32_0 = arith.constant 0 : i32
    %c0_i32_1 = arith.constant 0 : i32
    return %c0_i32, %c0_i32_0 : i32, i32
  }
  func.func @transform_1(%arg0: i32) -> (i32, i32) {
    %c0_i32 = arith.constant 0 : i32
    %c0_i32_0 = arith.constant 0 : i32
    return %c0_i32, %arg0 : i32, i32
  }
  func.func @transform_2(%arg0: i32) -> (i32, i32) {
    %c0_i32 = arith.constant 0 : i32
    %c0_i32_0 = arith.constant 0 : i32
    %c0_i32_1 = arith.constant 0 : i32
    return %c0_i32, %c0_i32_0 : i32, i32
  }
  func.func @transform_3(%arg0: i32) -> (i32, i32) {
    %c0_i32 = arith.constant 0 : i32
    %c0_i32_0 = arith.constant 0 : i32
    %c0_i32_1 = arith.constant 0 : i32
    return %c0_i32, %c0_i32_0 : i32, i32
  }
  func.func @transform_4(%arg0: i32) -> (i32, i32) {
    %c0_i32 = arith.constant 0 : i32
    %c0_i32_0 = arith.constant 0 : i32
    return %c0_i32, %arg0 : i32, i32
  }
  func.func @transform_5(%arg0: i32) -> (i32, i32) {
    %c0_i32 = arith.constant 0 : i32
    %c0_i32_0 = arith.constant 0 : i32
    return %c0_i32, %arg0 : i32, i32
  }
  func.func @transform_6(%arg0: i32) -> (i32, i32) {
    %c0_i32 = arith.constant 0 : i32
    %c0_i32_0 = arith.constant 0 : i32
    return %c0_i32, %arg0 : i32, i32
  }
}

module attributes {stable_mosaic.version = 11 : i64} {
  func.func @_triplet_wrt_kernel(%arg0: i32, %arg1: memref<8x128xf32, #tpu.memory_space<vmem>>, %arg2: memref<128x8xf32, #tpu.memory_space<vmem>>, %arg3: memref<8x1xf32, #tpu.memory_space<vmem>>, %arg4: memref<8x1xi32, #tpu.memory_space<vmem>>, %arg5: memref<1x8xf32, #tpu.memory_space<vmem>>, %arg6: memref<1x8xi32, #tpu.memory_space<vmem>>, %arg7: memref<1x8xf32, #tpu.memory_space<vmem>>) attributes {dimension_semantics = [#tpu.dimension_semantics<parallel>], iteration_bounds = array<i64: 1>, scalar_prefetch = 0 : i64, scratch_operands = 0 : i64, tpu.core_type = #tpu.core_type<tc>, window_params = [{pipeline_mode = #tpu.pipeline_mode<synchronous>, transform_indices = @transform_0, window_bounds = array<i64: 8, 128>}, {transform_indices = @transform_1, window_bounds = array<i64: 128, 8>}, {pipeline_mode = #tpu.pipeline_mode<synchronous>, transform_indices = @transform_2, window_bounds = array<i64: 8, 1>}, {pipeline_mode = #tpu.pipeline_mode<synchronous>, transform_indices = @transform_3, window_bounds = array<i64: 8, 1>}, {transform_indices = @transform_4, window_bounds = array<i64: 1, 8>}, {transform_indices = @transform_5, window_bounds = array<i64: 1, 8>}, {transform_indices = @transform_6, window_bounds = array<i64: 1, 8>}]} {
    %c0 = arith.constant 0 : index
    %c0_0 = arith.constant 0 : index
    %0 = vector.load %arg2[%c0, %c0_0] : memref<128x8xf32, #tpu.memory_space<vmem>>, vector<128x8xf32>
    %c0_1 = arith.constant 0 : index
    %c0_2 = arith.constant 0 : index
    %1 = vector.load %arg5[%c0_1, %c0_2] : memref<1x8xf32, #tpu.memory_space<vmem>>, vector<1x8xf32>
    %c0_3 = arith.constant 0 : index
    %c0_4 = arith.constant 0 : index
    %2 = vector.load %arg6[%c0_3, %c0_4] : memref<1x8xi32, #tpu.memory_space<vmem>>, vector<1x8xi32>
    %cst = arith.constant 0.000000e+00 : f32
    %3 = vector.broadcast %cst : f32 to vector<1x8xf32>
    %c0_i32 = arith.constant 0 : i32
    %c8_i32 = arith.constant 8 : i32
    %4 = arith.muli %c0_i32, %c8_i32 : i32
    %5 = tpu.assume_multiple %4, 8 : i32
    %6 = arith.index_cast %5 : i32 to index
    %c0_5 = arith.constant 0 : index
    %7 = vector.load %arg1[%6, %c0_5] : memref<8x128xf32, #tpu.memory_space<vmem>>, vector<8x128xf32>
    %cst_6 = arith.constant dense<0.000000e+00> : vector<8x8xf32>
    %8 = tpu.matmul %7, %0, %cst_6 {dimension_numbers = #tpu.dot_dimension_numbers<[1], [0], [0], [1], [0, 0, 1, 1], [], []>} : vector<8x128xf32>, vector<128x8xf32>, vector<8x8xf32> -> vector<8x8xf32>
    %9 = arith.index_cast %5 : i32 to index
    %c0_7 = arith.constant 0 : index
    %10 = vector.load %arg3[%9, %c0_7] : memref<8x1xf32, #tpu.memory_space<vmem>>, vector<8x1xf32>
    %11 = arith.index_cast %5 : i32 to index
    %c0_8 = arith.constant 0 : index
    %12 = vector.load %arg4[%11, %c0_8] : memref<8x1xi32, #tpu.memory_space<vmem>>, vector<8x1xi32>
    %13 = vector.broadcast %10 : vector<8x1xf32> to vector<8x8xf32>
    %14 = vector.broadcast %1 : vector<1x8xf32> to vector<8x8xf32>
    %15 = arith.addf %13, %14 : vector<8x8xf32>
    %cst_9 = arith.constant 2.000000e+00 : f32
    %16 = vector.broadcast %cst_9 : f32 to vector<8x8xf32>
    %17 = arith.mulf %16, %8 : vector<8x8xf32>
    %18 = arith.subf %15, %17 : vector<8x8xf32>
    %cst_10 = arith.constant 9.99999996E-13 : f32
    %19 = vector.broadcast %cst_10 : f32 to vector<8x8xf32>
    %20 = arith.maximumf %18, %19 : vector<8x8xf32>
    %21 = math.sqrt %20 : vector<8x8xf32>
    %22 = tpu.iota {dimensions = array<i32: 0>} : vector<8x1xi32>
    %23 = vector.broadcast %5 : i32 to vector<8x1xi32>
    %24 = arith.addi %22, %23 : vector<8x1xi32>
    %c8_i32_11 = arith.constant 8 : i32
    %25 = vector.broadcast %c8_i32_11 : i32 to vector<8x1xi32>
    %26 = arith.cmpi slt, %24, %25 : vector<8x1xi32>
    %27 = vector.broadcast %12 : vector<8x1xi32> to vector<8x8xi32>
    %28 = vector.broadcast %2 : vector<1x8xi32> to vector<8x8xi32>
    %29 = arith.cmpi eq, %27, %28 : vector<8x8xi32>
    %30 = vector.broadcast %26 : vector<8x1xi1> to vector<8x8xi1>
    %31 = arith.andi %29, %30 : vector<8x8xi1>
    %cst_12 = arith.constant dense<true> : vector<8x8xi1>
    %32 = arith.xori %29, %cst_12 : vector<8x8xi1>
    %33 = vector.broadcast %26 : vector<8x1xi1> to vector<8x8xi1>
    %34 = arith.andi %32, %33 : vector<8x8xi1>
    %cst_13 = arith.constant 0.000000e+00 : f32
    %35 = vector.broadcast %cst_13 : f32 to vector<8x8xf32>
    %36 = arith.select %31, %21, %35 : vector<8x8xi1>, vector<8x8xf32>
    %cst_14 = arith.constant dense<0xFF800000> : vector<8xf32>
    %37 = vector.multi_reduction <maximumf>, %36, %cst_14 [0] : vector<8x8xf32> to vector<8xf32>
    %38 = vector.shape_cast %37 : vector<8xf32> to vector<1x8xf32>
    %39 = arith.maximumf %3, %38 : vector<1x8xf32>
    %40 = arith.subf %3, %39 : vector<1x8xf32>
    %41 = math.exp %40 : vector<1x8xf32>
    %42 = vector.broadcast %39 : vector<1x8xf32> to vector<8x8xf32>
    %43 = arith.subf %36, %42 : vector<8x8xf32>
    %44 = math.exp %43 : vector<8x8xf32>
    %45 = arith.mulf %3, %41 : vector<1x8xf32>
    %cst_15 = arith.constant 0.000000e+00 : f32
    %46 = vector.broadcast %cst_15 : f32 to vector<8x8xf32>
    %47 = arith.select %31, %44, %46 : vector<8x8xi1>, vector<8x8xf32>
    %cst_16 = arith.constant dense<0.000000e+00> : vector<8xf32>
    %48 = vector.multi_reduction <add>, %47, %cst_16 [0] : vector<8x8xf32> to vector<8xf32>
    %49 = vector.shape_cast %48 : vector<8xf32> to vector<1x8xf32>
    %50 = arith.addf %45, %49 : vector<1x8xf32>
    %51 = arith.mulf %3, %41 : vector<1x8xf32>
    %52 = arith.mulf %36, %44 : vector<8x8xf32>
    %cst_17 = arith.constant dense<0.000000e+00> : vector<8xf32>
    %53 = vector.multi_reduction <add>, %52, %cst_17 [0] : vector<8x8xf32> to vector<8xf32>
    %54 = vector.shape_cast %53 : vector<8xf32> to vector<1x8xf32>
    %55 = arith.addf %51, %54 : vector<1x8xf32>
    %cst_18 = arith.constant 0.000000e+00 : f32
    %56 = vector.broadcast %cst_18 : f32 to vector<8x8xf32>
    %57 = arith.select %34, %21, %56 : vector<8x8xi1>, vector<8x8xf32>
    %cst_19 = arith.constant 0.000000e+00 : f32
    %58 = vector.broadcast %cst_19 : f32 to vector<8x8xf32>
    %59 = arith.subf %58, %57 : vector<8x8xf32>
    %60 = math.exp %59 : vector<8x8xf32>
    %cst_20 = arith.constant 0.000000e+00 : f32
    %61 = vector.broadcast %cst_20 : f32 to vector<8x8xf32>
    %62 = arith.select %34, %60, %61 : vector<8x8xi1>, vector<8x8xf32>
    %cst_21 = arith.constant dense<0.000000e+00> : vector<8xf32>
    %63 = vector.multi_reduction <add>, %62, %cst_21 [0] : vector<8x8xf32> to vector<8xf32>
    %64 = vector.shape_cast %63 : vector<8xf32> to vector<1x8xf32>
    %65 = arith.addf %3, %64 : vector<1x8xf32>
    %66 = arith.mulf %57, %60 : vector<8x8xf32>
    %cst_22 = arith.constant dense<0.000000e+00> : vector<8xf32>
    %67 = vector.multi_reduction <add>, %66, %cst_22 [0] : vector<8x8xf32> to vector<8xf32>
    %68 = vector.shape_cast %67 : vector<8xf32> to vector<1x8xf32>
    %69 = arith.addf %3, %68 : vector<1x8xf32>
    %c1_i32 = arith.constant 1 : i32
    %cst_23 = arith.constant 9.99999997E-7 : f32
    %70 = vector.broadcast %cst_23 : f32 to vector<1x8xf32>
    %71 = arith.addf %50, %70 : vector<1x8xf32>
    %72 = arith.divf %55, %71 : vector<1x8xf32>
    %cst_24 = arith.constant 9.99999997E-7 : f32
    %73 = vector.broadcast %cst_24 : f32 to vector<1x8xf32>
    %74 = arith.addf %65, %73 : vector<1x8xf32>
    %75 = arith.divf %69, %74 : vector<1x8xf32>
    %76 = arith.subf %75, %72 : vector<1x8xf32>
    %c0_25 = arith.constant 0 : index
    %c0_26 = arith.constant 0 : index
    %77 = vector.load %arg7[%c0_25, %c0_26] : memref<1x8xf32, #tpu.memory_space<vmem>>, vector<1x8xf32>
    tpu.vector_store %arg7[%c0_25, %c0_26], %76 {strides = array<i32>} : memref<1x8xf32, #tpu.memory_space<vmem>>, vector<1x8xf32>,
    return
  }
  func.func @transform_0(%arg0: i32) -> (i32, i32) {
    %c0_i32 = arith.constant 0 : i32
    %c0_i32_0 = arith.constant 0 : i32
    %c0_i32_1 = arith.constant 0 : i32
    return %c0_i32, %c0_i32_0 : i32, i32
  }
  func.func @transform_1(%arg0: i32) -> (i32, i32) {
    %c0_i32 = arith.constant 0 : i32
    %c0_i32_0 = arith.constant 0 : i32
    return %c0_i32, %arg0 : i32, i32
  }
  func.func @transform_2(%arg0: i32) -> (i32, i32) {
    %c0_i32 = arith.constant 0 : i32
    %c0_i32_0 = arith.constant 0 : i32
    %c0_i32_1 = arith.constant 0 : i32
    return %c0_i32, %c0_i32_0 : i32, i32
  }
  func.func @transform_3(%arg0: i32) -> (i32, i32) {
    %c0_i32 = arith.constant 0 : i32
    %c0_i32_0 = arith.constant 0 : i32
    %c0_i32_1 = arith.constant 0 : i32
    return %c0_i32, %c0_i32_0 : i32, i32
  }
  func.func @transform_4(%arg0: i32) -> (i32, i32) {
    %c0_i32 = arith.constant 0 : i32
    %c0_i32_0 = arith.constant 0 : i32
    return %c0_i32, %arg0 : i32, i32
  }
  func.func @transform_5(%arg0: i32) -> (i32, i32) {
    %c0_i32 = arith.constant 0 : i32
    %c0_i32_0 = arith.constant 0 : i32
    return %c0_i32, %arg0 : i32, i32
  }
  func.func @transform_6(%arg0: i32) -> (i32, i32) {
    %c0_i32 = arith.constant 0 : i32
    %c0_i32_0 = arith.constant 0 : i32
    return %c0_i32, %arg0 : i32, i32
  }
}

</mosaic_0001>

<llo_original>
// kernel: tpu_custom_call.1
$region0: #{tpu_custom_call.1}
  #allocation0 [shape = 'u32[]', space=smem, size = 0x4, offset = 0x4, fixed_abs, tag = 'smem constant byte address 0x4 - core index']
  #allocation1 [shape = 'u32[144,128]{1,0:T(1,128)}', space=vmem, size = 0x12000, scoped, tag = 'internal scratch']
  %s0 = inlined_call_operand.vmem [shape: f32[8,128], index: 0, kind: input, shape index: {}]
  %s1 = inlined_call_operand.vmem [shape: f32[128,8], index: 1, kind: input, shape index: {}]
  %s2 = inlined_call_operand.vmem [shape: f32[8,1], index: 2, kind: input, shape index: {}]
  %s3 = inlined_call_operand.vmem [shape: s32[8,1], index: 3, kind: input, shape index: {}]
  %s4 = inlined_call_operand.vmem [shape: f32[1,8], index: 4, kind: input, shape index: {}]
  %s5 = inlined_call_operand.vmem [shape: s32[1,8], index: 5, kind: input, shape index: {}]
  %s6 = inlined_call_operand.hbm [shape: f32[1,8], index: 6, kind: output, shape index: {}]
  %s7 = sld [smem:[#allocation0]]
  $region34: #{tpu_custom_call.1} parent=0
    _
  %s9 = ssub.s32 1, %s7
  %s10 = scalar_select 0, %s9, %s7
  $region1: #{tpu_custom_call.1} parent=0
    #allocation2 [shape = 'u8[512]{0}', space=vmem, size = 0x400, scoped, tag = 'output window, operand 0, single buffered']
    #allocation3 [shape = 's32[1]{0}', space=sflag, size = 0x4, scoped, tag = 'scoped memory for tpu_custom_call.1']
    %11 = vsyncpa [#allocation3], 0
    // Predicated region
    $region2: #{tpu_custom_call.1} parent=1 // pred_check
      _
    $region3: #{tpu_custom_call.1} parent=1 // pred_check_branch
      %13 = sbr.rel (0) target = $region5
    $region4: #{tpu_custom_call.1} parent=1 // pred_region
      _
    $region5: #{tpu_custom_call.1} parent=1 // pred_fallthru
      _
    // Predicated region
    $region6: #{tpu_custom_call.1} parent=1 // pred_check
      _
    $region7: #{tpu_custom_call.1} parent=1 // pred_check_branch
      %15 = sbr.rel (0) target = $region9
    $region8: #{tpu_custom_call.1} parent=1 // pred_region
      _
    $region9: #{tpu_custom_call.1} parent=1 // pred_fallthru
      _
    // Predicated region
    $region10: #{tpu_custom_call.1} parent=1 // pred_check
      _
    $region11: #{tpu_custom_call.1} parent=1 // pred_check_branch
      %17 = sbr.rel (0) target = $region13
    $region12: #{tpu_custom_call.1} parent=1 // pred_region
      _
    $region13: #{tpu_custom_call.1} parent=1 // pred_fallthru
      _
    // Predicated region
    $region14: #{tpu_custom_call.1} parent=1 // pred_check
      _
    $region15: #{tpu_custom_call.1} parent=1 // pred_check_branch
      %19 = sbr.rel (0) target = $region17
    $region16: #{tpu_custom_call.1} parent=1 // pred_region
      _
    $region17: #{tpu_custom_call.1} parent=1 // pred_fallthru
      _
    // Predicated region
    $region18: #{tpu_custom_call.1} parent=1 // pred_check
      _
    $region19: #{tpu_custom_call.1} parent=1 // pred_check_branch
      %21 = sbr.rel (0) target = $region21
    $region20: #{tpu_custom_call.1} parent=1 // pred_region
      _
    $region21: #{tpu_custom_call.1} parent=1 // pred_fallthru
      _
    // Predicated region
    $region22: #{tpu_custom_call.1} parent=1 // pred_check
      _
    $region23: #{tpu_custom_call.1} parent=1 // pred_check_branch
      %23 = sbr.rel (0) target = $region25
    $region24: #{tpu_custom_call.1} parent=1 // pred_region
      _
    $region25: #{tpu_custom_call.1} parent=1 // pred_fallthru
      _
    %v24 = vld [vmem:[%s1] sm:$0xff]
    %v25 = vld [vmem:[%s1 + $0x8] sm:$0xff]
    %v26 = vld [vmem:[%s1 + $0x10] sm:$0xff]
    %v27 = vld [vmem:[%s1 + $0x18] sm:$0xff]
    %v28 = vld [vmem:[%s1 + $0x20] sm:$0xff]
    %v29 = vld [vmem:[%s1 + $0x28] sm:$0xff]
    %v30 = vld [vmem:[%s1 + $0x30] sm:$0xff]
    %v31 = vld [vmem:[%s1 + $0x38] sm:$0xff]
    %v32 = vld [vmem:[%s1 + $0x40] sm:$0xff]
    %v33 = vld [vmem:[%s1 + $0x48] sm:$0xff]
    %v34 = vld [vmem:[%s1 + $0x50] sm:$0xff]
    %v35 = vld [vmem:[%s1 + $0x58] sm:$0xff]
    %v36 = vld [vmem:[%s1 + $0x60] sm:$0xff]
    %v37 = vld [vmem:[%s1 + $0x68] sm:$0xff]
    %v38 = vld [vmem:[%s1 + $0x70] sm:$0xff]
    %v39 = vld [vmem:[%s1 + $0x78] sm:$0xff]
    %v40 = vld [vmem:[%s4] sm:$0x1]
    %v41 = vld [vmem:[%s5] sm:$0x1]
    %v42 = vld [vmem:[%s0] sm:$0xff]
    %43 = vmatprep.subr.mxu0 0.0
    %44 = vmatpush1.msra.mxu0 %v24
    %45 = vmatprep.subr.mxu0 0.0
    %46 = vmatpush1.msra.mxu0 %v25
    %47 = vmatprep.subr.mxu0 0.0
    %48 = vmatpush1.msra.mxu0 %v26
    %49 = vmatprep.subr.mxu0 0.0
    %50 = vmatpush1.msra.mxu0 %v27
    %51 = vmatprep.subr.mxu0 0.0
    %52 = vmatpush1.msra.mxu0 %v28
    %53 = vmatprep.subr.mxu0 0.0
    %54 = vmatpush1.msra.mxu0 %v29
    %55 = vmatprep.subr.mxu0 0.0
    %56 = vmatpush1.msra.mxu0 %v30
    %57 = vmatprep.subr.mxu0 0.0
    %58 = vmatpush1.msra.mxu0 %v31
    %59 = vmatprep.subr.mxu0 0.0
    %60 = vmatpush1.msra.mxu0 %v32
    %61 = vmatprep.subr.mxu0 0.0
    %62 = vmatpush1.msra.mxu0 %v33
    %63 = vmatprep.subr.mxu0 0.0
    %64 = vmatpush1.msra.mxu0 %v34
    %65 = vmatprep.subr.mxu0 0.0
    %66 = vmatpush1.msra.mxu0 %v35
    %67 = vmatprep.subr.mxu0 0.0
    %68 = vmatpush1.msra.mxu0 %v36
    %69 = vmatprep.subr.mxu0 0.0
    %70 = vmatpush1.msra.mxu0 %v37
    %71 = vmatprep.subr.mxu0 0.0
    %72 = vmatpush1.msra.mxu0 %v38
    %73 = vmatprep.subr.mxu0 0.0
    %74 = vmatpush1.msra.mxu0 %v39
    %75 = vmatprep.subr.mxu0 0.0
    %76 = vmatpush1.msra.mxu0 0.0
    %77 = vmatprep.subr.mxu0 0.0
    %78 = vmatpush1.msra.mxu0 0.0
    %79 = vmatprep.subr.mxu0 0.0
    %80 = vmatpush1.msra.mxu0 0.0
    %81 = vmatprep.subr.mxu0 0.0
    %82 = vmatpush1.msra.mxu0 0.0
    %83 = vmatprep.subr.mxu0 0.0
    %84 = vmatpush1.msra.mxu0 0.0
    %85 = vmatprep.subr.mxu0 0.0
    %86 = vmatpush1.msra.mxu0 0.0
    %87 = vmatprep.subr.mxu0 0.0
    %88 = vmatpush1.msra.mxu0 0.0
    %89 = vmatprep.subr.mxu0 0.0
    %90 = vmatpush1.msra.mxu0 0.0
    %91 = vmatprep.subr.mxu0 0.0
    %92 = vmatpush1.msra.mxu0 0.0
    %93 = vmatprep.subr.mxu0 0.0
    %94 = vmatpush1.msra.mxu0 0.0
    %95 = vmatprep.subr.mxu0 0.0
    %96 = vmatpush1.msra.mxu0 0.0
    %97 = vmatprep.subr.mxu0 0.0
    %98 = vmatpush1.msra.mxu0 0.0
    %99 = vmatprep.subr.mxu0 0.0
    %100 = vmatpush1.msra.mxu0 0.0
    %101 = vmatprep.subr.mxu0 0.0
    %102 = vmatpush1.msra.mxu0 0.0
    %103 = vmatprep.subr.mxu0 0.0
    %104 = vmatpush1.msra.mxu0 0.0
    %105 = vmatprep.subr.mxu0 0.0
    %106 = vmatpush1.msra.mxu0 0.0
    %107 = vmatprep.mubr.f32.mxu0 0.0
    %108 = vmatmul.mubr.f32.gmra.mrb[0].mxu0 %v42
    %v109 = vpop.f32.mrb[0].mxu0
    %v110 = vadd.f32 0.0, %v109
    %v111 = vpop.f32.mrb[0].mxu0
    %112 = vdwg.mxu0
    %v113 = vld [vmem:[%s2] sm:$0xff]
    %v114 = vld [vmem:[%s3] sm:$0xff]
    %116 = vset.pattern.permute.xlu0 0
    %117 = vperm.xlu0 %116, %v113
    %v118 = vpop.permute.xlu0 %117
    %v121 = vlaneseq
    %v122 = vshrl.u32 %v121, 7
    %v123 = vsub.s32 0, %v122
    %v124 = vrot.slane %v40, %v123
    %v126 = vadd.f32 %v118, %v124
    %v127 = vmul.f32 %v110, 2.0
    %v128 = vsub.f32 %v126, %v127
    %v129 = vmax.f32 %v128, 1e-12
    %v130 = vrsqrt.pop %v129
    %v131 = vmul.f32 %v129, %v130
    %vm132 = vcmp.eq.f32.partialorder %v129, inf
    %v133 = vsel %vm132, %v129, %v131
    %vm134 = vcmp.eq.f32.partialorder %v129, 0.0
    %v135 = vand.u32 %v129, 2147483648
    %v136 = vsel %vm134, %v135, %v133
    %v137 = vlaneseq
    %v138 = vshrl.u32 %v137, 7
    %v139 = vstv 0
    %v140 = vadd.s32 %v138, %v139
    %vm141 = vcmp.lt.s32.totalorder %v140, 8
    %142 = vset.pattern.permute.xlu0 0
    %143 = vperm.xlu0 %142, %v114
    %v144 = vpop.permute.xlu0 %143
    %v145 = vlaneseq
    %v146 = vshrl.u32 %v145, 7
    %v147 = vsub.s32 0, %v146
    %v148 = vrot.slane %v41, %v147
    %vm149 = vcmp.eq.s32.totalorder %v144, %v148
    %v150 = vsel %vm141, 1, 0
    %vm151 = vcmp.eq.s32.totalorder %v150, 1
    %vm152 = vmand %vm149, %vm151
    %vm153 = vmxor %vm149, 1
    %vm154 = vmand %vm153, %vm151
    %v155 = vsel %vm152, %v136, 0.0
    %vm156 = vcmask 64512
    %v157 = vsel %vm156, %v155, -inf
    %v158 = vrot.slane %v157, 4
    %v159 = vmax.f32 %v157, %v158
    %v160 = vrot.slane %v159, 2
    %v161 = vmax.f32 %v159, %v160
    %v162 = vrot.slane %v161, 1
    %v163 = vmax.f32 %v161, %v162
    %v164 = vmax.f32 %v163, 0.0
    %v165 = vsub.f32 0.0, %v164
    %v166 = vmul.f32 %v165, 1.442695
    %v167 = vpow.pop %v166
    %v168 = vsub.f32 %v155, %v164
    %v169 = vmul.f32 %v168, 1.442695
    %v170 = vpow.pop %v169
    %v171 = vmul.f32 %v167, 0.0
    %v172 = vsel %vm152, %v170, 0.0
    %v173 = vsel %vm156, %v172, 0.0
    %v174 = vrot.slane %v173, 4
    %v175 = vadd.f32 %v173, %v174
    %v176 = vrot.slane %v175, 2
    %v177 = vadd.f32 %v175, %v176
    %v178 = vrot.slane %v177, 1
    %v179 = vadd.f32 %v177, %v178
    %v180 = vadd.f32 %v171, %v179
    %v181 = vmul.f32 %v155, %v170
    %v182 = vsel %vm156, %v181, 0.0
    %v183 = vrot.slane %v182, 4
    %v184 = vadd.f32 %v182, %v183
    %v185 = vrot.slane %v184, 2
    %v186 = vadd.f32 %v184, %v185
    %v187 = vrot.slane %v186, 1
    %v188 = vadd.f32 %v186, %v187
    %v189 = vadd.f32 %v171, %v188
    %v190 = vsel %vm154, %v136, 0.0
    %v191 = vsub.f32 0.0, %v190
    %v192 = vmul.f32 %v191, 1.442695
    %v193 = vpow.pop %v192
    %v194 = vsel %vm154, %v193, 0.0
    %v195 = vsel %vm156, %v194, 0.0
    %v196 = vrot.slane %v195, 4
    %v197 = vadd.f32 %v195, %v196
    %v198 = vrot.slane %v197, 2
    %v199 = vadd.f32 %v197, %v198
    %v200 = vrot.slane %v199, 1
    %v201 = vadd.f32 %v199, %v200
    %v202 = vadd.f32 %v201, 0.0
    %v203 = vmul.f32 %v190, %v193
    %v204 = vsel %vm156, %v203, 0.0
    %v205 = vrot.slane %v204, 4
    %v206 = vadd.f32 %v204, %v205
    %v207 = vrot.slane %v206, 2
    %v208 = vadd.f32 %v206, %v207
    %v209 = vrot.slane %v208, 1
    %v210 = vadd.f32 %v208, %v209
    %v211 = vadd.f32 %v210, 0.0
    %v212 = vadd.f32 %v180, 1e-06
    %v213 = vrcp.pop %v212
    %v214 = vmul.f32 %v189, %v213
    %v215 = vadd.f32 %v202, 1e-06
    %v216 = vrcp.pop %v215
    %v217 = vmul.f32 %v211, %v216
    %v218 = vsub.f32 %v217, %v214
    %vm219 = vcmask 57344
    %220 = vst.msk [vmem:[#allocation2] sm:$0x1] %vm219, %v218
    // Predicated region
    $region26: #{tpu_custom_call.1} parent=1 // pred_check
      _
    $region27: #{tpu_custom_call.1} parent=1 // pred_check_branch
      %222 = sbr.rel (0) target = $region29
    $region28: #{tpu_custom_call.1} parent=1 // pred_region
      %s224 = ssub.s32 16, 16
      %225 = vsyncadd [#allocation3], %s224
      %s227 = sshll.u32 [#allocation2], 4
      %s228 = int_to_ptr.vmem [resolvable:$true] %s227
      %230 = dma.vmem_to_hbm [thread:$0]  %s228, 16, %s6, [#allocation3]
    $region29: #{tpu_custom_call.1} parent=1 // pred_fallthru
      _
    // Predicated region
    $region30: #{tpu_custom_call.1} parent=1 // pred_check
      _
    $region31: #{tpu_custom_call.1} parent=1 // pred_check_branch
      %232 = sbr.rel (0) target = $region33
    $region32: #{tpu_custom_call.1} parent=1 // pred_region
      %233 = dma.done [#allocation3], 16
    $region33: #{tpu_custom_call.1} parent=1 // pred_fallthru
      _
    %234 = vsyncpa [#allocation3], 1

// kernel: tpu_custom_call.1
$region0: #{tpu_custom_call.1}
  #allocation0 [shape = 'u32[]', space=smem, size = 0x4, offset = 0x4, fixed_abs, tag = 'smem constant byte address 0x4 - core index']
  #allocation1 [shape = 'u32[144,128]{1,0:T(1,128)}', space=vmem, size = 0x12000, scoped, tag = 'internal scratch']
  %s0 = inlined_call_operand.vmem [shape: f32[8,128], index: 0, kind: input, shape index: {}]
  %s1 = inlined_call_operand.vmem [shape: f32[128,8], index: 1, kind: input, shape index: {}]
  %s2 = inlined_call_operand.vmem [shape: f32[8,1], index: 2, kind: input, shape index: {}]
  %s3 = inlined_call_operand.vmem [shape: s32[8,1], index: 3, kind: input, shape index: {}]
  %s4 = inlined_call_operand.vmem [shape: f32[1,8], index: 4, kind: input, shape index: {}]
  %s5 = inlined_call_operand.vmem [shape: s32[1,8], index: 5, kind: input, shape index: {}]
  %s6 = inlined_call_operand.hbm [shape: f32[1,8], index: 6, kind: output, shape index: {}]
  %s7 = sld [smem:[#allocation0]]
  $region34: #{tpu_custom_call.1} parent=0
    _
  %s9 = ssub.s32 1, %s7
  %s10 = scalar_select 0, %s9, %s7
  $region1: #{tpu_custom_call.1} parent=0
    #allocation2 [shape = 'u8[512]{0}', space=vmem, size = 0x400, scoped, tag = 'output window, operand 0, single buffered']
    #allocation3 [shape = 's32[1]{0}', space=sflag, size = 0x4, scoped, tag = 'scoped memory for tpu_custom_call.1']
    %11 = vsyncpa [#allocation3], 0
    // Predicated region
    $region2: #{tpu_custom_call.1} parent=1 // pred_check
      _
    $region3: #{tpu_custom_call.1} parent=1 // pred_check_branch
      %13 = sbr.rel (0) target = $region5
    $region4: #{tpu_custom_call.1} parent=1 // pred_region
      _
    $region5: #{tpu_custom_call.1} parent=1 // pred_fallthru
      _
    // Predicated region
    $region6: #{tpu_custom_call.1} parent=1 // pred_check
      _
    $region7: #{tpu_custom_call.1} parent=1 // pred_check_branch
      %15 = sbr.rel (0) target = $region9
    $region8: #{tpu_custom_call.1} parent=1 // pred_region
      _
    $region9: #{tpu_custom_call.1} parent=1 // pred_fallthru
      _
    // Predicated region
    $region10: #{tpu_custom_call.1} parent=1 // pred_check
      _
    $region11: #{tpu_custom_call.1} parent=1 // pred_check_branch
      %17 = sbr.rel (0) target = $region13
    $region12: #{tpu_custom_call.1} parent=1 // pred_region
      _
    $region13: #{tpu_custom_call.1} parent=1 // pred_fallthru
      _
    // Predicated region
    $region14: #{tpu_custom_call.1} parent=1 // pred_check
      _
    $region15: #{tpu_custom_call.1} parent=1 // pred_check_branch
      %19 = sbr.rel (0) target = $region17
    $region16: #{tpu_custom_call.1} parent=1 // pred_region
      _
    $region17: #{tpu_custom_call.1} parent=1 // pred_fallthru
      _
    // Predicated region
    $region18: #{tpu_custom_call.1} parent=1 // pred_check
      _
    $region19: #{tpu_custom_call.1} parent=1 // pred_check_branch
      %21 = sbr.rel (0) target = $region21
    $region20: #{tpu_custom_call.1} parent=1 // pred_region
      _
    $region21: #{tpu_custom_call.1} parent=1 // pred_fallthru
      _
    // Predicated region
    $region22: #{tpu_custom_call.1} parent=1 // pred_check
      _
    $region23: #{tpu_custom_call.1} parent=1 // pred_check_branch
      %23 = sbr.rel (0) target = $region25
    $region24: #{tpu_custom_call.1} parent=1 // pred_region
      _
    $region25: #{tpu_custom_call.1} parent=1 // pred_fallthru
      _
    %v24 = vld [vmem:[%s1] sm:$0xff]
    %v25 = vld [vmem:[%s1 + $0x8] sm:$0xff]
    %v26 = vld [vmem:[%s1 + $0x10] sm:$0xff]
    %v27 = vld [vmem:[%s1 + $0x18] sm:$0xff]
    %v28 = vld [vmem:[%s1 + $0x20] sm:$0xff]
    %v29 = vld [vmem:[%s1 + $0x28] sm:$0xff]
    %v30 = vld [vmem:[%s1 + $0x30] sm:$0xff]
    %v31 = vld [vmem:[%s1 + $0x38] sm:$0xff]
    %v32 = vld [vmem:[%s1 + $0x40] sm:$0xff]
    %v33 = vld [vmem:[%s1 + $0x48] sm:$0xff]
    %v34 = vld [vmem:[%s1 + $0x50] sm:$0xff]
    %v35 = vld [vmem:[%s1 + $0x58] sm:$0xff]
    %v36 = vld [vmem:[%s1 + $0x60] sm:$0xff]
    %v37 = vld [vmem:[%s1 + $0x68] sm:$0xff]
    %v38 = vld [vmem:[%s1 + $0x70] sm:$0xff]
    %v39 = vld [vmem:[%s1 + $0x78] sm:$0xff]
    %v40 = vld [vmem:[%s4] sm:$0x1]
    %v41 = vld [vmem:[%s5] sm:$0x1]
    %v42 = vld [vmem:[%s0] sm:$0xff]
    %43 = vmatprep.subr.mxu0 0.0
    %44 = vmatpush1.msra.mxu0 %v24
    %45 = vmatprep.subr.mxu0 0.0
    %46 = vmatpush1.msra.mxu0 %v25
    %47 = vmatprep.subr.mxu0 0.0
    %48 = vmatpush1.msra.mxu0 %v26
    %49 = vmatprep.subr.mxu0 0.0
    %50 = vmatpush1.msra.mxu0 %v27
    %51 = vmatprep.subr.mxu0 0.0
    %52 = vmatpush1.msra.mxu0 %v28
    %53 = vmatprep.subr.mxu0 0.0
    %54 = vmatpush1.msra.mxu0 %v29
    %55 = vmatprep.subr.mxu0 0.0
    %56 = vmatpush1.msra.mxu0 %v30
    %57 = vmatprep.subr.mxu0 0.0
    %58 = vmatpush1.msra.mxu0 %v31
    %59 = vmatprep.subr.mxu0 0.0
    %60 = vmatpush1.msra.mxu0 %v32
    %61 = vmatprep.subr.mxu0 0.0
    %62 = vmatpush1.msra.mxu0 %v33
    %63 = vmatprep.subr.mxu0 0.0
    %64 = vmatpush1.msra.mxu0 %v34
    %65 = vmatprep.subr.mxu0 0.0
    %66 = vmatpush1.msra.mxu0 %v35
    %67 = vmatprep.subr.mxu0 0.0
    %68 = vmatpush1.msra.mxu0 %v36
    %69 = vmatprep.subr.mxu0 0.0
    %70 = vmatpush1.msra.mxu0 %v37
    %71 = vmatprep.subr.mxu0 0.0
    %72 = vmatpush1.msra.mxu0 %v38
    %73 = vmatprep.subr.mxu0 0.0
    %74 = vmatpush1.msra.mxu0 %v39
    %75 = vmatprep.subr.mxu0 0.0
    %76 = vmatpush1.msra.mxu0 0.0
    %77 = vmatprep.subr.mxu0 0.0
    %78 = vmatpush1.msra.mxu0 0.0
    %79 = vmatprep.subr.mxu0 0.0
    %80 = vmatpush1.msra.mxu0 0.0
    %81 = vmatprep.subr.mxu0 0.0
    %82 = vmatpush1.msra.mxu0 0.0
    %83 = vmatprep.subr.mxu0 0.0
    %84 = vmatpush1.msra.mxu0 0.0
    %85 = vmatprep.subr.mxu0 0.0
    %86 = vmatpush1.msra.mxu0 0.0
    %87 = vmatprep.subr.mxu0 0.0
    %88 = vmatpush1.msra.mxu0 0.0
    %89 = vmatprep.subr.mxu0 0.0
    %90 = vmatpush1.msra.mxu0 0.0
    %91 = vmatprep.subr.mxu0 0.0
    %92 = vmatpush1.msra.mxu0 0.0
    %93 = vmatprep.subr.mxu0 0.0
    %94 = vmatpush1.msra.mxu0 0.0
    %95 = vmatprep.subr.mxu0 0.0
    %96 = vmatpush1.msra.mxu0 0.0
    %97 = vmatprep.subr.mxu0 0.0
    %98 = vmatpush1.msra.mxu0 0.0
    %99 = vmatprep.subr.mxu0 0.0
    %100 = vmatpush1.msra.mxu0 0.0
    %101 = vmatprep.subr.mxu0 0.0
    %102 = vmatpush1.msra.mxu0 0.0
    %103 = vmatprep.subr.mxu0 0.0
    %104 = vmatpush1.msra.mxu0 0.0
    %105 = vmatprep.subr.mxu0 0.0
    %106 = vmatpush1.msra.mxu0 0.0
    %107 = vmatprep.mubr.f32.mxu0 0.0
    %108 = vmatmul.mubr.f32.gmra.mrb[0].mxu0 %v42
    %v109 = vpop.f32.mrb[0].mxu0
    %v110 = vadd.f32 0.0, %v109
    %v111 = vpop.f32.mrb[0].mxu0
    %112 = vdwg.mxu0
    %v113 = vld [vmem:[%s2] sm:$0xff]
    %v114 = vld [vmem:[%s3] sm:$0xff]
    %116 = vset.pattern.permute.xlu0 0
    %117 = vperm.xlu0 %116, %v113
    %v118 = vpop.permute.xlu0 %117
    %v121 = vlaneseq
    %v122 = vshrl.u32 %v121, 7
    %v123 = vsub.s32 0, %v122
    %v124 = vrot.slane %v40, %v123
    %v126 = vadd.f32 %v118, %v124
    %v127 = vmul.f32 %v110, 2.0
    %v128 = vsub.f32 %v126, %v127
    %v129 = vmax.f32 %v128, 1e-12
    %v130 = vrsqrt.pop %v129
    %v131 = vmul.f32 %v129, %v130
    %vm132 = vcmp.eq.f32.partialorder %v129, inf
    %v133 = vsel %vm132, %v129, %v131
    %vm134 = vcmp.eq.f32.partialorder %v129, 0.0
    %v135 = vand.u32 %v129, 2147483648
    %v136 = vsel %vm134, %v135, %v133
    %v137 = vlaneseq
    %v138 = vshrl.u32 %v137, 7
    %v139 = vstv 0
    %v140 = vadd.s32 %v138, %v139
    %vm141 = vcmp.lt.s32.totalorder %v140, 8
    %142 = vset.pattern.permute.xlu0 0
    %143 = vperm.xlu0 %142, %v114
    %v144 = vpop.permute.xlu0 %143
    %v145 = vlaneseq
    %v146 = vshrl.u32 %v145, 7
    %v147 = vsub.s32 0, %v146
    %v148 = vrot.slane %v41, %v147
    %vm149 = vcmp.eq.s32.totalorder %v144, %v148
    %v150 = vsel %vm141, 1, 0
    %vm151 = vcmp.eq.s32.totalorder %v150, 1
    %vm152 = vmand %vm149, %vm151
    %vm153 = vmxor %vm149, 1
    %vm154 = vmand %vm153, %vm151
    %v155 = vsel %vm152, %v136, 0.0
    %vm156 = vcmask 64512
    %v157 = vsel %vm156, %v155, -inf
    %v158 = vrot.slane %v157, 4
    %v159 = vmax.f32 %v157, %v158
    %v160 = vrot.slane %v159, 2
    %v161 = vmax.f32 %v159, %v160
    %v162 = vrot.slane %v161, 1
    %v163 = vmax.f32 %v161, %v162
    %v164 = vmax.f32 %v163, 0.0
    %v165 = vsub.f32 0.0, %v164
    %v166 = vmul.f32 %v165, 1.442695
    %v167 = vpow.pop %v166
    %v168 = vsub.f32 %v155, %v164
    %v169 = vmul.f32 %v168, 1.442695
    %v170 = vpow.pop %v169
    %v171 = vmul.f32 %v167, 0.0
    %v172 = vsel %vm152, %v170, 0.0
    %v173 = vsel %vm156, %v172, 0.0
    %v174 = vrot.slane %v173, 4
    %v175 = vadd.f32 %v173, %v174
    %v176 = vrot.slane %v175, 2
    %v177 = vadd.f32 %v175, %v176
    %v178 = vrot.slane %v177, 1
    %v179 = vadd.f32 %v177, %v178
    %v180 = vadd.f32 %v171, %v179
    %v181 = vmul.f32 %v155, %v170
    %v182 = vsel %vm156, %v181, 0.0
    %v183 = vrot.slane %v182, 4
    %v184 = vadd.f32 %v182, %v183
    %v185 = vrot.slane %v184, 2
    %v186 = vadd.f32 %v184, %v185
    %v187 = vrot.slane %v186, 1
    %v188 = vadd.f32 %v186, %v187
    %v189 = vadd.f32 %v171, %v188
    %v190 = vsel %vm154, %v136, 0.0
    %v191 = vsub.f32 0.0, %v190
    %v192 = vmul.f32 %v191, 1.442695
    %v193 = vpow.pop %v192
    %v194 = vsel %vm154, %v193, 0.0
    %v195 = vsel %vm156, %v194, 0.0
    %v196 = vrot.slane %v195, 4
    %v197 = vadd.f32 %v195, %v196
    %v198 = vrot.slane %v197, 2
    %v199 = vadd.f32 %v197, %v198
    %v200 = vrot.slane %v199, 1
    %v201 = vadd.f32 %v199, %v200
    %v202 = vadd.f32 %v201, 0.0
    %v203 = vmul.f32 %v190, %v193
    %v204 = vsel %vm156, %v203, 0.0
    %v205 = vrot.slane %v204, 4
    %v206 = vadd.f32 %v204, %v205
    %v207 = vrot.slane %v206, 2
    %v208 = vadd.f32 %v206, %v207
    %v209 = vrot.slane %v208, 1
    %v210 = vadd.f32 %v208, %v209
    %v211 = vadd.f32 %v210, 0.0
    %v212 = vadd.f32 %v180, 1e-06
    %v213 = vrcp.pop %v212
    %v214 = vmul.f32 %v189, %v213
    %v215 = vadd.f32 %v202, 1e-06
    %v216 = vrcp.pop %v215
    %v217 = vmul.f32 %v211, %v216
    %v218 = vsub.f32 %v217, %v214
    %vm219 = vcmask 57344
    %220 = vst.msk [vmem:[#allocation2] sm:$0x1] %vm219, %v218
    // Predicated region
    $region26: #{tpu_custom_call.1} parent=1 // pred_check
      _
    $region27: #{tpu_custom_call.1} parent=1 // pred_check_branch
      %222 = sbr.rel (0) target = $region29
    $region28: #{tpu_custom_call.1} parent=1 // pred_region
      %s224 = ssub.s32 16, 16
      %225 = vsyncadd [#allocation3], %s224
      %s227 = sshll.u32 [#allocation2], 4
      %s228 = int_to_ptr.vmem [resolvable:$true] %s227
      %230 = dma.vmem_to_hbm [thread:$0]  %s228, 16, %s6, [#allocation3]
    $region29: #{tpu_custom_call.1} parent=1 // pred_fallthru
      _
    // Predicated region
    $region30: #{tpu_custom_call.1} parent=1 // pred_check
      _
    $region31: #{tpu_custom_call.1} parent=1 // pred_check_branch
      %232 = sbr.rel (0) target = $region33
    $region32: #{tpu_custom_call.1} parent=1 // pred_region
      %233 = dma.done [#allocation3], 16
    $region33: #{tpu_custom_call.1} parent=1 // pred_fallthru
      _
    %234 = vsyncpa [#allocation3], 1

</llo_original>
